<compile_context>
chip_gen: v7x
topology: tpu7x:2x2x1
jax: 0.10.0
libtpu: 0.0.40
codegen_flags: <defaults>
</compile_context>

<pallas_src>
import functools
from collections import namedtuple

import jax
import jax.numpy as jnp
from jax import lax
from jax.experimental import pallas as pl
from jax.experimental.pallas import tpu as pltpu

BN_EPS = 1e-5

Plan = namedtuple("Plan", ["n_pad", "tn", "num_n", "k_pad", "tk", "num_k", "vmem_limit"])
PreparedParams = namedtuple(
    "PreparedParams", ["w", "gamma2", "beta2", "nin", "nout", "plan", "matmul_dtype"])


def _round_up(x, m):
    return ((x + m - 1) // m) * m


def _tpu_vmem_capacity_bytes():
    try:
        cap = getattr(pltpu.get_tpu_info(), "vmem_capacity_bytes", None)
        if cap:
            return int(cap)
    except Exception:
        pass
    return 128 * 1024 * 1024


def make_plan(nin, nout, *, max_tk=None):
    cap = _tpu_vmem_capacity_bytes()
    # ~40 MiB scoped budget on 64 MiB (v7x) parts, ~80 MiB on 128 MiB (v5e/v6e) parts.
    vmem_limit = max(16 * 1024 * 1024, int(cap) * 5 // 8)
    if max_tk is None:
        max_tk = 1024 if cap <= 96 * 1024 * 1024 else 4096

    n_pad = _round_up(nout, 128)
    tn = 128
    for cand in (512, 256, 128):
        # Prefer num_n >= 2 so the "parallel" feature axis can feed both v7x cores.
        if n_pad % cand == 0 and n_pad // cand >= 2:
            tn = cand
            break
    num_n = n_pad // tn

    if nin <= max_tk:
        tk, k_pad, num_k = nin, nin, 1
    else:
        tk = max(128, (max_tk // 128) * 128)
        k_pad = _round_up(nin, tk)
        num_k = k_pad // tk
    return Plan(n_pad, tn, num_n, k_pad, tk, num_k, vmem_limit)


def prepare_params(weight, gamma, beta, bias=None, *,
                   matmul_dtype=jnp.bfloat16, max_tk=None):
    """Pad / transpose / cast the Linear+BN parameters ONCE (hoisted off the hot path).

    weight: (nout, nin) PyTorch nn.Linear layout.
    bias:   accepted for API parity; under training-mode BatchNorm it cancels in
            (y - mean(y)), so it is dropped.
    """
    del bias
    nout, nin = weight.shape
    plan = make_plan(nin, nout, max_tk=max_tk)
    w = weight.T                                  # (nin, nout): standard contraction dims
    if matmul_dtype is not None:
        w = w.astype(matmul_dtype)                # bf16 weight in HBM by default
    w = jnp.pad(w, ((0, plan.k_pad - nin), (0, plan.n_pad - nout)))
    g = jnp.pad(gamma.astype(jnp.float32), (0, plan.n_pad - nout)).reshape(1, plan.n_pad)
    b = jnp.pad(beta.astype(jnp.float32), (0, plan.n_pad - nout)).reshape(1, plan.n_pad)
    return PreparedParams(w=w, gamma2=g, beta2=b, nin=nin, nout=nout, plan=plan,
                          matmul_dtype=matmul_dtype)


# ----------------------------- kernel helpers --------------------------------------

def _mxu(x, w, matmul_dtype):
    if matmul_dtype is not None:
        x = x.astype(matmul_dtype)
        w = w.astype(matmul_dtype)
    return lax.dot_general(x, w, (((1,), (0,)), ((), ())),
                           preferred_element_type=jnp.float32)


def _bn_write(y, g_ref, b_ref, out_ref, apply_relu, inv_batch):
    # Centered variance (robust against E[y^2]-E[y]^2 cancellation); all f32.
    mean = jnp.sum(y, axis=0, keepdims=True) * inv_batch
    c = y - mean
    var = jnp.sum(c * c, axis=0, keepdims=True) * inv_batch
    scale = g_ref[...] * lax.rsqrt(var + BN_EPS)
    out = c * scale + b_ref[...]
    if apply_relu:
        out = jnp.maximum(out, 0.0)
    out_ref[...] = out.astype(out_ref.dtype)


# ----------------------------- fused (small/medium batch) path ---------------------

def _fused_kernel(x_ref, w_ref, g_ref, b_ref, out_ref, *scratch,
                  apply_relu, inv_batch, matmul_dtype, num_k, tk, x_resident):
    if num_k == 1:
        # Single-K specialization: no accumulator round-trip through VMEM scratch.
        y = _mxu(x_ref[...], w_ref[...], matmul_dtype)
        _bn_write(y, g_ref, b_ref, out_ref, apply_relu, inv_batch)
        return

    acc_ref, = scratch
    k = pl.program_id(1)

    @pl.when(k == 0)
    def _():
        acc_ref[...] = jnp.zeros_like(acc_ref)

    if x_resident:
        # x block is the full (B, k_pad) slab, DMA'd once; slice the K tile in VMEM.
        start = pl.multiple_of(k * tk, 128)
        x = x_ref[:, pl.ds(start, tk)]
    else:
        x = x_ref[...]
    acc_ref[...] += _mxu(x, w_ref[...], matmul_dtype)

    @pl.when(k == num_k - 1)
    def _():
        _bn_write(acc_ref[...], g_ref, b_ref, out_ref, apply_relu, inv_batch)


def _forward_fused(x, params, relu, batch, x_resident):
    plan = params.plan
    kernel = functools.partial(
        _fused_kernel, apply_relu=bool(relu), inv_batch=1.0 / batch,
        matmul_dtype=params.matmul_dtype, num_k=plan.num_k, tk=plan.tk,
        x_resident=bool(x_resident))

    if plan.num_k == 1:
        grid = (plan.num_n,)
        in_specs = [pl.BlockSpec((batch, plan.k_pad), lambda j: (0, 0)),   # x (resident)
                    pl.BlockSpec((plan.k_pad, plan.tn), lambda j: (0, j)),  # weight strip
                    pl.BlockSpec((1, plan.tn), lambda j: (0, j)),           # gamma
                    pl.BlockSpec((1, plan.tn), lambda j: (0, j))]           # beta
        out_specs = pl.BlockSpec((batch, plan.tn), lambda j: (0, j))
        scratch = []
        semantics = ("parallel",)
    else:
        grid = (plan.num_n, plan.num_k)                 # reduction axis last
        if x_resident:
            x_spec = pl.BlockSpec((batch, plan.k_pad), lambda j, k: (0, 0))
        else:
            x_spec = pl.BlockSpec((batch, plan.tk), lambda j, k: (0, k))
        in_specs = [x_spec,
                    pl.BlockSpec((plan.tk, plan.tn), lambda j, k: (k, j)),
                    pl.BlockSpec((1, plan.tn), lambda j, k: (0, j)),
                    pl.BlockSpec((1, plan.tn), lambda j, k: (0, j))]
        out_specs = pl.BlockSpec((batch, plan.tn), lambda j, k: (0, j))
        scratch = [pltpu.VMEM((batch, plan.tn), jnp.float32)]
        semantics = ("parallel", "arbitrary")

    return pl.pallas_call(
        kernel,
        out_shape=jax.ShapeDtypeStruct((batch, plan.n_pad), x.dtype),
        grid_spec=pltpu.PrefetchScalarGridSpec(
            num_scalar_prefetch=0, grid=grid, in_specs=in_specs,
            out_specs=out_specs, scratch_shapes=scratch),
        compiler_params=pltpu.CompilerParams(
            dimension_semantics=semantics, vmem_limit_bytes=plan.vmem_limit),
    )(x, params.w, params.gamma2, params.beta2)


# ----------------------------- two-pass (large batch) path -------------------------

def _linear_stats_kernel(x_ref, w_ref, y_ref, stats_ref, acc_ref, s_ref, *,
                         matmul_dtype, num_k, tb, batch):
    b = pl.program_id(1)
    k = pl.program_id(2)

    @pl.when(k == 0)
    def _():
        acc_ref[...] = jnp.zeros_like(acc_ref)

    @pl.when((b == 0) & (k == 0))
    def _():
        s_ref[...] = jnp.zeros_like(s_ref)

    acc_ref[...] += _mxu(x_ref[...], w_ref[...], matmul_dtype)

    @pl.when(k == num_k - 1)
    def _():
        y = acc_ref[...]                                        # (tb, tn) f32
        y_ref[...] = y                                          # pre-BN activations
        row = lax.broadcasted_iota(jnp.int32, (tb, 1), 0) + b * tb
        valid = (row < batch).astype(jnp.float32)               # mask padded batch rows
        yv = y * valid

        @pl.when(b == 0)
        def _():
            # Per-feature shift r ~= mean (from the first batch tile) so the shifted
            # sums below avoid E[y^2]-E[y]^2 cancellation.
            s_ref[2:3, :] = (jnp.sum(yv, axis=0, keepdims=True)
                             * (1.0 / float(min(tb, batch))))

        r = s_ref[2:3, :]
        d = (y - r) * valid
        s_ref[0:1, :] += jnp.sum(d, axis=0, keepdims=True)
        s_ref[1:2, :] += jnp.sum(d * d, axis=0, keepdims=True)

        @pl.when(b == pl.num_programs(1) - 1)
        def _():
            stats_ref[...] = s_ref[...]


def _bn_apply_kernel(y_ref, stats_ref, g_ref, b_ref, out_ref, *, apply_relu, inv_batch):
    s1 = stats_ref[0:1, :]
    s2 = stats_ref[1:2, :]
    r = stats_ref[2:3, :]
    mc = s1 * inv_batch                                   # mean of (y - r)
    var = jnp.maximum(s2 * inv_batch - mc * mc, 0.0)
    mean = r + mc
    scale = g_ref[...] * lax.rsqrt(var + BN_EPS)
    shift = b_ref[...] - mean * scale
    out = y_ref[...] * scale + shift
    if apply_relu:
        out = jnp.maximum(out, 0.0)
    out_ref[...] = out.astype(out_ref.dtype)


def _pick_batch_tile(batch, plan, in_itemsize, w_itemsize):
    cap = _round_up(batch, 8)
    budget = plan.vmem_limit // 2
    for cand in (512, 256, 128, 64, 32, 16, 8):
        tb = min(cand, cap)
        est = (2 * tb * plan.tk * in_itemsize          # x blocks (double-buffered)
               + 2 * plan.tk * plan.tn * w_itemsize    # weight tiles
               + 3 * tb * plan.tn * 4)                 # y out blocks + accumulator
        if est <= budget:
            return tb
    return 8


def _forward_two_pass(x, params, relu, batch, batch_tile, out_dtype):
    plan = params.plan
    if batch_tile is None:
        batch_tile = _pick_batch_tile(batch, plan, x.dtype.itemsize,
                                      params.w.dtype.itemsize)
    tb = int(batch_tile)
    if tb % 8 != 0:
        raise ValueError("batch_tile must be a multiple of 8")
    b_pad = _round_up(batch, tb)
    if b_pad != batch:
        x = jnp.pad(x, ((0, b_pad - batch), (0, 0)))
    num_b = b_pad // tb

    # Pass 1: Linear (K-reduced on the MXU) + full-batch shifted BN partial sums.
    kernel1 = functools.partial(
        _linear_stats_kernel, matmul_dtype=params.matmul_dtype,
        num_k=plan.num_k, tb=tb, batch=batch)
    y, stats = pl.pallas_call(
        kernel1,
        out_shape=(jax.ShapeDtypeStruct((b_pad, plan.n_pad), jnp.float32),
                   jax.ShapeDtypeStruct((3, plan.n_pad), jnp.float32)),
        grid_spec=pltpu.PrefetchScalarGridSpec(
            num_scalar_prefetch=0,
            grid=(plan.num_n, num_b, plan.num_k),          # features, batch, reduction(K)
            in_specs=[pl.BlockSpec((tb, plan.tk), lambda j, b, k: (b, k)),
                      pl.BlockSpec((plan.tk, plan.tn), lambda j, b, k: (k, j))],
            out_specs=[pl.BlockSpec((tb, plan.tn), lambda j, b, k: (b, j)),
                       pl.BlockSpec((3, plan.tn), lambda j, b, k: (0, j))],
            scratch_shapes=[pltpu.VMEM((tb, plan.tn), jnp.float32),
                            pltpu.VMEM((3, plan.tn), jnp.float32)]),
        compiler_params=pltpu.CompilerParams(
            dimension_semantics=("parallel", "arbitrary", "arbitrary"),
            vmem_limit_bytes=plan.vmem_limit),
    )(x, params.w)

    # Pass 2: elementwise scale/shift (+ReLU) with the full-batch statistics.
    kernel2 = functools.partial(_bn_apply_kernel, apply_relu=bool(relu),
                                inv_batch=1.0 / batch)
    out = pl.pallas_call(
        kernel2,
        out_shape=jax.ShapeDtypeStruct((b_pad, plan.n_pad), out_dtype),
        grid_spec=pltpu.PrefetchScalarGridSpec(
            num_scalar_prefetch=0,
            grid=(num_b, plan.num_n),
            in_specs=[pl.BlockSpec((tb, plan.tn), lambda b, j: (b, j)),
                      pl.BlockSpec((3, plan.tn), lambda b, j: (0, j)),
                      pl.BlockSpec((1, plan.tn), lambda b, j: (0, j)),
                      pl.BlockSpec((1, plan.tn), lambda b, j: (0, j))],
            out_specs=pl.BlockSpec((tb, plan.tn), lambda b, j: (b, j)),
            scratch_shapes=[]),
        compiler_params=pltpu.CompilerParams(
            dimension_semantics=("parallel", "parallel"),
            vmem_limit_bytes=plan.vmem_limit),
    )(y, stats, params.gamma2, params.beta2)
    return out[:batch]


# ----------------------------- public API ------------------------------------------

def nn_bn_relu_forward(x, params, relu=True, *, force_two_pass=False,
                       batch_tile=None, x_resident=None):
    """Fused Linear -> BatchNorm1d(training batch stats) -> optional ReLU."""
    batch, nin = x.shape
    if nin != params.nin:
        raise ValueError(f"expected nin={params.nin}, got {nin}")
    plan = params.plan
    out_dtype = x.dtype

    if plan.k_pad != nin:                       # only x may need per-call K padding
        x = jnp.pad(x, ((0, 0), (0, plan.k_pad - nin)))

    in_sz = x.dtype.itemsize
    w_sz = params.w.dtype.itemsize
    w_tile = 2 * plan.tk * plan.tn * w_sz
    common = (2 * batch * plan.tn * in_sz
              + (batch * plan.tn * 4 if plan.num_k > 1 else 0))
    fused_streamed = 2 * batch * plan.tk * in_sz + w_tile + common
    fused_resident = 2 * batch * plan.k_pad * in_sz + w_tile + common

    use_two_pass = (force_two_pass or batch_tile is not None
                    or fused_streamed > plan.vmem_limit // 2)
    if use_two_pass:
        out = _forward_two_pass(x, params, relu, batch, batch_tile, out_dtype)
    else:
        if x_resident is None:
            x_resident = (plan.num_k > 1
                          and fused_resident <= (plan.vmem_limit * 6) // 10)
        out = _forward_fused(x, params, relu, batch, x_resident)

    if plan.n_pad != params.nout:
        out = out[:, :params.nout]
    return out


def nn_bn_relu(x, weight, bias, gamma, beta, relu=True, *,
               matmul_dtype=jnp.bfloat16, **kwargs):
    """One-shot convenience API. Prefer prepare_params(...) once + nn_bn_relu_forward(...)
    so the weight pad/transpose/cast never sits on the per-call hot path."""
    params = prepare_params(weight, gamma, beta, bias, matmul_dtype=matmul_dtype)
    return nn_bn_relu_forward(x, params, relu=relu, **kwargs)


# ----------------------------- reference + self-test -------------------------------

def _reference(x, weight, bias, gamma, beta, relu=True):
    y = jnp.dot(x, weight.T, precision=lax.Precision.HIGHEST) + bias
    mean = jnp.mean(y, axis=0, keepdims=True)
    var = jnp.mean((y - mean) ** 2, axis=0, keepdims=True)
    out = (y - mean) / jnp.sqrt(var + BN_EPS) * gamma + beta
    if relu:
        out = jnp.maximum(out, 0.0)
    return out


def _reference_bf16(x, weight, bias, gamma, beta, relu=True):
    # Reference for the bf16-operand kernel path: round operands exactly as the kernel
    # does (bf16 weights in HBM + in-kernel bf16 cast of x), accumulate in f32.
    xr = x.astype(jnp.bfloat16).astype(jnp.float32)
    wr = weight.astype(jnp.bfloat16).astype(jnp.float32)
    return _reference(xr, wr, bias, gamma, beta, relu)


def _init_params(key, nin, nout, random_affine=False):
    kw, kb, kg, kbe = jax.random.split(key, 4)
    bound = 1.0 / (nin ** 0.5)
    weight = jax.random.uniform(kw, (nout, nin), minval=-bound, maxval=bound,
                                dtype=jnp.float32)
    bias = jax.random.uniform(kb, (nout,), minval=-bound, maxval=bound,
                              dtype=jnp.float32)
    if random_affine:
        gamma = jax.random.uniform(kg, (nout,), minval=0.5, maxval=1.5,
                                   dtype=jnp.float32)
        beta = jax.random.normal(kbe, (nout,), dtype=jnp.float32) * 0.1
    else:
        gamma = jnp.ones((nout,), dtype=jnp.float32)   # fresh BatchNorm1d init
        beta = jnp.zeros((nout,), dtype=jnp.float32)
    return weight, bias, gamma, beta


if __name__ == "__main__":
    keys = jax.random.split(jax.random.PRNGKey(0), 8)

    # ---- Case 1: tiny shapes; f32 MXU path (tight check) + default bf16 path --------
    B, nin, nout = 8, 32, 32
    x = jax.random.normal(keys[0], (B, nin), dtype=jnp.float32)
    weight, bias, gamma, beta = _init_params(keys[1], nin, nout)

    p32 = prepare_params(weight, gamma, beta, bias, matmul_dtype=jnp.float32)
    out = jax.block_until_ready(nn_bn_relu_forward(x, p32, relu=True))
    ref = _reference(x, weight, bias, gamma, beta, relu=True)
    assert out.shape == (B, nout)
    assert jnp.allclose(out, ref, atol=1e-4, rtol=1e-4), "case1 f32 relu mismatch"

    out_nr = jax.block_until_ready(nn_bn_relu_forward(x, p32, relu=False))
    ref_nr = _reference(x, weight, bias, gamma, beta, relu=False)
    assert jnp.allclose(out_nr, ref_nr, atol=1e-4, rtol=1e-4), "case1 f32 no-relu mismatch"

    out_bf = jax.block_until_ready(
        nn_bn_relu(x, weight, bias, gamma, beta, relu=True))   # default bf16 weights
    ref_bf = _reference_bf16(x, weight, bias, gamma, beta, relu=True)
    assert jnp.allclose(out_bf, ref_bf, atol=1e-2, rtol=1e-2), "case1 bf16 mismatch"

    # ---- Case 2: multiple feature tiles + nout padding, non-trivial affine, bf16 ----
    B, nin, nout = 16, 96, 320
    x = jax.random.normal(keys[2], (B, nin), dtype=jnp.float32)
    weight, bias, gamma, beta = _init_params(keys[3], nin, nout, random_affine=True)
    params = prepare_params(weight, gamma, beta, bias)          # bf16 default
    out = jax.block_until_ready(nn_bn_relu_forward(x, params, relu=True))
    ref = _reference_bf16(x, weight, bias, gamma, beta, relu=True)
    assert out.shape == (B, nout)
    assert jnp.allclose(out, ref, atol=1e-2, rtol=1e-2), "case2 mismatch"

    # ---- Case 3: K-split accumulator path; resident vs streamed x; f32 tight --------
    B, nin, nout = 8, 256, 64
    x = jax.random.normal(keys[4], (B, nin), dtype=jnp.float32)
    weight, bias, gamma, beta = _init_params(keys[5], nin, nout, random_affine=True)
    params = prepare_params(weight, gamma, beta, bias,
                            matmul_dtype=jnp.float32, max_tk=128)
    ref = _reference(x, weight, bias, gamma, beta, relu=True)
    for resident in (True, False):
        out = jax.block_until_ready(
            nn_bn_relu_forward(x, params, relu=True, x_resident=resident))
        assert out.shape == (B, nout)
        assert jnp.allclose(out, ref, atol=1e-4, rtol=1e-4), \
            f"case3 mismatch (x_resident={resident})"

    # ---- Case 4: large-batch two-pass path (batch tiling, full-batch BN stats) ------
    B, nin, nout = 200, 160, 192
    x = jax.random.normal(keys[6], (B, nin), dtype=jnp.float32)
    weight, bias, gamma, beta = _init_params(keys[7], nin, nout, random_affine=True)

    p32 = prepare_params(weight, gamma, beta, bias,
                         matmul_dtype=jnp.float32, max_tk=128)
    out = jax.block_until_ready(
        nn_bn_relu_forward(x, p32, relu=True, force_two_pass=True, batch_tile=64))
    ref = _reference(x, weight, bias, gamma, beta, relu=True)
    assert out.shape == (B, nout)
    assert jnp.allclose(out, ref, atol=1e-4, rtol=1e-4), "case4 f32 two-pass mismatch"

    pbf = prepare_params(weight, gamma, beta, bias, max_tk=128)     # bf16 default
    out_bf = jax.block_until_ready(
        nn_bn_relu_forward(x, pbf, relu=True, force_two_pass=True, batch_tile=64))
    ref_bf = _reference_bf16(x, weight, bias, gamma, beta, relu=True)
    assert jnp.allclose(out_bf, ref_bf, atol=1e-2, rtol=1e-2), "case4 bf16 two-pass mismatch"

    print("KERNEL_OK")
</pallas_src>

<mosaic_0001>
module attributes {stable_mosaic.version = 11 : i64} {
  func.func @_fused_kernel(%arg0: i32, %arg1: memref<8x32xf32, #tpu.memory_space<vmem>>, %arg2: memref<32x128xf32, #tpu.memory_space<vmem>>, %arg3: memref<1x128xf32, #tpu.memory_space<vmem>>, %arg4: memref<1x128xf32, #tpu.memory_space<vmem>>, %arg5: memref<8x128xf32, #tpu.memory_space<vmem>>) attributes {dimension_semantics = [#tpu.dimension_semantics<parallel>], iteration_bounds = array<i64: 1>, scalar_prefetch = 0 : i64, scratch_operands = 0 : i64, tpu.core_type = #tpu.core_type<tc>, window_params = [{pipeline_mode = #tpu.pipeline_mode<synchronous>, transform_indices = @transform_0, window_bounds = array<i64: 8, 32>}, {transform_indices = @transform_1, window_bounds = array<i64: 32, 128>}, {transform_indices = @transform_2, window_bounds = array<i64: 1, 128>}, {transform_indices = @transform_3, window_bounds = array<i64: 1, 128>}, {transform_indices = @transform_4, window_bounds = array<i64: 8, 128>}]} {
    %c0 = arith.constant 0 : index
    %c0_0 = arith.constant 0 : index
    %0 = vector.load %arg1[%c0, %c0_0] : memref<8x32xf32, #tpu.memory_space<vmem>>, vector<8x32xf32>
    %c0_1 = arith.constant 0 : index
    %c0_2 = arith.constant 0 : index
    %1 = vector.load %arg2[%c0_1, %c0_2] : memref<32x128xf32, #tpu.memory_space<vmem>>, vector<32x128xf32>
    %cst = arith.constant dense<0.000000e+00> : vector<8x128xf32>
    %2 = tpu.matmul %0, %1, %cst {dimension_numbers = #tpu.dot_dimension_numbers<[1], [0], [0], [1], [0, 0, 1, 1], [], []>} : vector<8x32xf32>, vector<32x128xf32>, vector<8x128xf32> -> vector<8x128xf32>
    %cst_3 = arith.constant dense<0.000000e+00> : vector<128xf32>
    %3 = vector.multi_reduction <add>, %2, %cst_3 [0] : vector<8x128xf32> to vector<128xf32>
    %4 = vector.shape_cast %3 : vector<128xf32> to vector<1x128xf32>
    %cst_4 = arith.constant 1.250000e-01 : f32
    %5 = vector.broadcast %cst_4 : f32 to vector<1x128xf32>
    %6 = arith.mulf %4, %5 : vector<1x128xf32>
    %7 = vector.broadcast %6 : vector<1x128xf32> to vector<8x128xf32>
    %8 = arith.subf %2, %7 : vector<8x128xf32>
    %9 = arith.mulf %8, %8 : vector<8x128xf32>
    %cst_5 = arith.constant dense<0.000000e+00> : vector<128xf32>
    %10 = vector.multi_reduction <add>, %9, %cst_5 [0] : vector<8x128xf32> to vector<128xf32>
    %11 = vector.shape_cast %10 : vector<128xf32> to vector<1x128xf32>
    %cst_6 = arith.constant 1.250000e-01 : f32
    %12 = vector.broadcast %cst_6 : f32 to vector<1x128xf32>
    %13 = arith.mulf %11, %12 : vector<1x128xf32>
    %c0_7 = arith.constant 0 : index
    %c0_8 = arith.constant 0 : index
    %14 = vector.load %arg3[%c0_7, %c0_8] : memref<1x128xf32, #tpu.memory_space<vmem>>, vector<1x128xf32>
    %cst_9 = arith.constant 9.99999974E-6 : f32
    %15 = vector.broadcast %cst_9 : f32 to vector<1x128xf32>
    %16 = arith.addf %13, %15 : vector<1x128xf32>
    %17 = math.rsqrt %16 : vector<1x128xf32>
    %18 = arith.mulf %14, %17 : vector<1x128xf32>
    %19 = vector.broadcast %18 : vector<1x128xf32> to vector<8x128xf32>
    %20 = arith.mulf %8, %19 : vector<8x128xf32>
    %c0_10 = arith.constant 0 : index
    %c0_11 = arith.constant 0 : index
    %21 = vector.load %arg4[%c0_10, %c0_11] : memref<1x128xf32, #tpu.memory_space<vmem>>, vector<1x128xf32>
    %22 = vector.broadcast %21 : vector<1x128xf32> to vector<8x128xf32>
    %23 = arith.addf %20, %22 : vector<8x128xf32>
    %cst_12 = arith.constant 0.000000e+00 : f32
    %24 = vector.broadcast %cst_12 : f32 to vector<8x128xf32>
    %25 = arith.maximumf %23, %24 : vector<8x128xf32>
    %c0_13 = arith.constant 0 : index
    %c0_14 = arith.constant 0 : index
    %26 = vector.load %arg5[%c0_13, %c0_14] : memref<8x128xf32, #tpu.memory_space<vmem>>, vector<8x128xf32>
    tpu.vector_store %arg5[%c0_13, %c0_14], %25 {strides = array<i32>} : memref<8x128xf32, #tpu.memory_space<vmem>>, vector<8x128xf32>,
    return
  }
  func.func @transform_0(%arg0: i32) -> (i32, i32) {
    %c0_i32 = arith.constant 0 : i32
    %c0_i32_0 = arith.constant 0 : i32
    %c0_i32_1 = arith.constant 0 : i32
    return %c0_i32, %c0_i32_0 : i32, i32
  }
  func.func @transform_1(%arg0: i32) -> (i32, i32) {
    %c0_i32 = arith.constant 0 : i32
    %c0_i32_0 = arith.constant 0 : i32
    return %c0_i32, %arg0 : i32, i32
  }
  func.func @transform_2(%arg0: i32) -> (i32, i32) {
    %c0_i32 = arith.constant 0 : i32
    %c0_i32_0 = arith.constant 0 : i32
    return %c0_i32, %arg0 : i32, i32
  }
  func.func @transform_3(%arg0: i32) -> (i32, i32) {
    %c0_i32 = arith.constant 0 : i32
    %c0_i32_0 = arith.constant 0 : i32
    return %c0_i32, %arg0 : i32, i32
  }
  func.func @transform_4(%arg0: i32) -> (i32, i32) {
    %c0_i32 = arith.constant 0 : i32
    %c0_i32_0 = arith.constant 0 : i32
    return %c0_i32, %arg0 : i32, i32
  }
}

</mosaic_0001>

<llo_original>
// kernel: tpu_custom_call.1
$region0: #{tpu_custom_call.1}
  #allocation0 [shape = 'u32[]', space=smem, size = 0x4, offset = 0x4, fixed_abs, tag = 'smem constant byte address 0x4 - core index']
  #allocation1 [shape = 'u32[144,128]{1,0:T(1,128)}', space=vmem, size = 0x12000, scoped, tag = 'internal scratch']
  %s0 = inlined_call_operand.hbm [shape: f32[8,32], index: 0, kind: input, shape index: {}]
  %s1 = inlined_call_operand.hbm [shape: f32[32,128], index: 1, kind: input, shape index: {}]
  %s2 = inlined_call_operand.hbm [shape: f32[1,128], index: 2, kind: input, shape index: {}]
  %s3 = inlined_call_operand.hbm [shape: f32[1,128], index: 3, kind: input, shape index: {}]
  %s4 = inlined_call_operand.hbm [shape: f32[8,128], index: 4, kind: output, shape index: {}]
  %s5 = sld [smem:[#allocation0]]
  $region42: #{tpu_custom_call.1} parent=0
    _
  %s7 = ssub.s32 1, %s5
  %s8 = scalar_select 0, %s7, %s5
  $region1: #{tpu_custom_call.1} parent=0
    #allocation2 [shape = 'u8[4096]{0}', space=vmem, size = 0x1000, scoped, tag = 'input window, operand 0, single buffered']
    #allocation3 [shape = 's32[1]{0}', space=sflag, size = 0x4, scoped, tag = 'scoped memory for tpu_custom_call.1']
    #allocation4 [shape = 's32[1]{0}', space=sflag, size = 0x4, scoped, tag = 'scoped memory for tpu_custom_call.1']
    #allocation5 [shape = 'u8[16384]{0}', space=vmem, size = 0x4000, scoped, tag = 'input window, operand 1, single buffered']
    #allocation6 [shape = 's32[1]{0}', space=sflag, size = 0x4, scoped, tag = 'scoped memory for tpu_custom_call.1']
    #allocation7 [shape = 'u8[512]{0}', space=vmem, size = 0x400, scoped, tag = 'input window, operand 2, single buffered']
    #allocation8 [shape = 'u8[512]{0}', space=vmem, size = 0x400, scoped, tag = 'input window, operand 3, single buffered']
    #allocation9 [shape = 's32[1]{0}', space=sflag, size = 0x4, scoped, tag = 'scoped memory for tpu_custom_call.1']
    #allocation10 [shape = 'u8[4096]{0}', space=vmem, size = 0x1000, scoped, tag = 'output window, operand 0, single buffered']
    %9 = vsyncpa [#allocation3], 0
    %10 = vsyncpa [#allocation6], 0
    %11 = vsyncpa [#allocation9], 0
    %12 = vsyncpa [#allocation4], 0
    // Predicated region
    $region2: #{tpu_custom_call.1} parent=1 // pred_check
      _
    $region3: #{tpu_custom_call.1} parent=1 // pred_check_branch
      %14 = sbr.rel (0) target = $region5
    $region4: #{tpu_custom_call.1} parent=1 // pred_region
      %s16 = ssub.s32 128, 128
      %17 = vsyncadd [#allocation3], %s16
      %s19 = sshll.u32 [#allocation2], 4
      %s20 = int_to_ptr.vmem [resolvable:$true] %s19
      %22 = dma.hbm_to_vmem [thread:$0]  %s0, 128, %s20, [#allocation3]
    $region5: #{tpu_custom_call.1} parent=1 // pred_fallthru
      _
    // Predicated region
    $region6: #{tpu_custom_call.1} parent=1 // pred_check
      _
    $region7: #{tpu_custom_call.1} parent=1 // pred_check_branch
      %24 = sbr.rel (0) target = $region9
    $region8: #{tpu_custom_call.1} parent=1 // pred_region
      %s26 = ssub.s32 512, 512
      %27 = vsyncadd [#allocation6], %s26
      %s28 = sshll.u32 [#allocation5], 4
      %s29 = int_to_ptr.vmem [resolvable:$true] %s28
      %34 = dma.hbm_to_vmem [thread:$0]  %s1, 512, %s29, [#allocation6], 128, 128, 8
    $region9: #{tpu_custom_call.1} parent=1 // pred_fallthru
      _
    // Predicated region
    $region10: #{tpu_custom_call.1} parent=1 // pred_check
      _
    $region11: #{tpu_custom_call.1} parent=1 // pred_check_branch
      %36 = sbr.rel (0) target = $region13
    $region12: #{tpu_custom_call.1} parent=1 // pred_region
      %s38 = ssub.s32 16, 16
      %39 = vsyncadd [#allocation6], %s38
      %s41 = sshll.u32 [#allocation7], 4
      %s42 = int_to_ptr.vmem [resolvable:$true] %s41
      %44 = dma.hbm_to_vmem [thread:$0]  %s2, 16, %s42, [#allocation6]
    $region13: #{tpu_custom_call.1} parent=1 // pred_fallthru
      _
    // Predicated region
    $region14: #{tpu_custom_call.1} parent=1 // pred_check
      _
    $region15: #{tpu_custom_call.1} parent=1 // pred_check_branch
      %46 = sbr.rel (0) target = $region17
    $region16: #{tpu_custom_call.1} parent=1 // pred_region
      %s48 = ssub.s32 16, 16
      %49 = vsyncadd [#allocation9], %s48
      %s51 = sshll.u32 [#allocation8], 4
      %s52 = int_to_ptr.vmem [resolvable:$true] %s51
      %54 = dma.hbm_to_vmem [thread:$0]  %s3, 16, %s52, [#allocation9]
    $region17: #{tpu_custom_call.1} parent=1 // pred_fallthru
      _
    // Predicated region
    $region18: #{tpu_custom_call.1} parent=1 // pred_check
      _
    $region19: #{tpu_custom_call.1} parent=1 // pred_check_branch
      %56 = sbr.rel (0) target = $region21
    $region20: #{tpu_custom_call.1} parent=1 // pred_region
      %57 = dma.done [#allocation3], 128
    $region21: #{tpu_custom_call.1} parent=1 // pred_fallthru
      _
    // Predicated region
    $region22: #{tpu_custom_call.1} parent=1 // pred_check
      _
    $region23: #{tpu_custom_call.1} parent=1 // pred_check_branch
      %59 = sbr.rel (0) target = $region25
    $region24: #{tpu_custom_call.1} parent=1 // pred_region
      %60 = dma.done [#allocation6], 512
    $region25: #{tpu_custom_call.1} parent=1 // pred_fallthru
      _
    // Predicated region
    $region26: #{tpu_custom_call.1} parent=1 // pred_check
      _
    $region27: #{tpu_custom_call.1} parent=1 // pred_check_branch
      %62 = sbr.rel (0) target = $region29
    $region28: #{tpu_custom_call.1} parent=1 // pred_region
      %63 = dma.done [#allocation6], 16
    $region29: #{tpu_custom_call.1} parent=1 // pred_fallthru
      _
    // Predicated region
    $region30: #{tpu_custom_call.1} parent=1 // pred_check
      _
    $region31: #{tpu_custom_call.1} parent=1 // pred_check_branch
      %65 = sbr.rel (0) target = $region33
    $region32: #{tpu_custom_call.1} parent=1 // pred_region
      %66 = dma.done [#allocation9], 16
    $region33: #{tpu_custom_call.1} parent=1 // pred_fallthru
      _
    %v67 = vld [vmem:[#allocation2] sm:$0xff]
    %v68 = vld [vmem:[#allocation5] sm:$0xff]
    %v69 = vld [vmem:[#allocation5 + $0x8] sm:$0xff]
    %v70 = vld [vmem:[#allocation5 + $0x10] sm:$0xff]
    %v71 = vld [vmem:[#allocation5 + $0x18] sm:$0xff]
    %vm72 = vcmask 261120
    %v74 = vsel %vm72, %v67, 0
    %76 = vmatprep.subr.mxu0 0.0
    %77 = vmatpush1.msra.mxu0 %v68
    %78 = vmatprep.subr.mxu0 0.0
    %79 = vmatpush1.msra.mxu0 %v69
    %80 = vmatprep.subr.mxu0 0.0
    %81 = vmatpush1.msra.mxu0 %v70
    %82 = vmatprep.subr.mxu0 0.0
    %83 = vmatpush1.msra.mxu0 %v71
    %84 = vmatprep.subr.mxu0 0.0
    %85 = vmatpush1.msra.mxu0 0.0
    %86 = vmatprep.subr.mxu0 0.0
    %87 = vmatpush1.msra.mxu0 0.0
    %88 = vmatprep.subr.mxu0 0.0
    %89 = vmatpush1.msra.mxu0 0.0
    %90 = vmatprep.subr.mxu0 0.0
    %91 = vmatpush1.msra.mxu0 0.0
    %92 = vmatprep.subr.mxu0 0.0
    %93 = vmatpush1.msra.mxu0 0.0
    %94 = vmatprep.subr.mxu0 0.0
    %95 = vmatpush1.msra.mxu0 0.0
    %96 = vmatprep.subr.mxu0 0.0
    %97 = vmatpush1.msra.mxu0 0.0
    %98 = vmatprep.subr.mxu0 0.0
    %99 = vmatpush1.msra.mxu0 0.0
    %100 = vmatprep.subr.mxu0 0.0
    %101 = vmatpush1.msra.mxu0 0.0
    %102 = vmatprep.subr.mxu0 0.0
    %103 = vmatpush1.msra.mxu0 0.0
    %104 = vmatprep.subr.mxu0 0.0
    %105 = vmatpush1.msra.mxu0 0.0
    %106 = vmatprep.subr.mxu0 0.0
    %107 = vmatpush1.msra.mxu0 0.0
    %108 = vmatprep.subr.mxu0 0.0
    %109 = vmatpush1.msra.mxu0 0.0
    %110 = vmatprep.subr.mxu0 0.0
    %111 = vmatpush1.msra.mxu0 0.0
    %112 = vmatprep.subr.mxu0 0.0
    %113 = vmatpush1.msra.mxu0 0.0
    %114 = vmatprep.subr.mxu0 0.0
    %115 = vmatpush1.msra.mxu0 0.0
    %116 = vmatprep.subr.mxu0 0.0
    %117 = vmatpush1.msra.mxu0 0.0
    %118 = vmatprep.subr.mxu0 0.0
    %119 = vmatpush1.msra.mxu0 0.0
    %120 = vmatprep.subr.mxu0 0.0
    %121 = vmatpush1.msra.mxu0 0.0
    %122 = vmatprep.subr.mxu0 0.0
    %123 = vmatpush1.msra.mxu0 0.0
    %124 = vmatprep.subr.mxu0 0.0
    %125 = vmatpush1.msra.mxu0 0.0
    %126 = vmatprep.subr.mxu0 0.0
    %127 = vmatpush1.msra.mxu0 0.0
    %128 = vmatprep.subr.mxu0 0.0
    %129 = vmatpush1.msra.mxu0 0.0
    %130 = vmatprep.subr.mxu0 0.0
    %131 = vmatpush1.msra.mxu0 0.0
    %132 = vmatprep.subr.mxu0 0.0
    %133 = vmatpush1.msra.mxu0 0.0
    %134 = vmatprep.subr.mxu0 0.0
    %135 = vmatpush1.msra.mxu0 0.0
    %136 = vmatprep.subr.mxu0 0.0
    %137 = vmatpush1.msra.mxu0 0.0
    %138 = vmatprep.subr.mxu0 0.0
    %139 = vmatpush1.msra.mxu0 0.0
    %140 = vmatprep.mubr.f32.mxu0 0.0
    %141 = vmatmul.mubr.f32.gmra.mrb[0].mxu0 %v74
    %v142 = vpop.f32.mrb[0].mxu0
    %v143 = vadd.f32 0.0, %v142
    %v144 = vpop.f32.mrb[0].mxu0
    %145 = vdwg.mxu0
    %v146 = vrot.slane %v143, 4
    %v147 = vadd.f32 %v143, %v146
    %v148 = vrot.slane %v147, 2
    %v149 = vadd.f32 %v147, %v148
    %v150 = vrot.slane %v149, 1
    %v151 = vadd.f32 %v149, %v150
    %v152 = vmul.f32 %v151, 0.125
    %v153 = vsub.f32 %v143, %v152
    %v154 = vmul.f32 %v153, %v153
    %v155 = vrot.slane %v154, 4
    %v156 = vadd.f32 %v154, %v155
    %v157 = vrot.slane %v156, 2
    %v158 = vadd.f32 %v156, %v157
    %v159 = vrot.slane %v158, 1
    %v160 = vadd.f32 %v158, %v159
    %v161 = vmul.f32 %v160, 0.125
    %v162 = vld [vmem:[#allocation7] sm:$0x1]
    %v163 = vadd.f32 %v161, 1e-05
    %v164 = vrsqrt.pop %v163
    %v165 = vmul.f32 %v162, %v164
    %v167 = vlaneseq
    %v168 = vshrl.u32 %v167, 7
    %v169 = vsub.s32 0, %v168
    %v170 = vrot.slane %v165, %v169
    %v172 = vmul.f32 %v153, %v170
    %v173 = vld [vmem:[#allocation8] sm:$0x1]
    %v175 = vlaneseq
    %v176 = vshrl.u32 %v175, 7
    %v177 = vsub.s32 0, %v176
    %v178 = vrot.slane %v173, %v177
    %v180 = vadd.f32 %v172, %v178
    %v181 = vmax.f32 %v180, 0.0
    %182 = vst [vmem:[#allocation10] sm:$0xff] %v181
    // Predicated region
    $region34: #{tpu_custom_call.1} parent=1 // pred_check
      _
    $region35: #{tpu_custom_call.1} parent=1 // pred_check_branch
      %184 = sbr.rel (0) target = $region37
    $region36: #{tpu_custom_call.1} parent=1 // pred_region
      %s186 = ssub.s32 128, 128
      %187 = vsyncadd [#allocation4], %s186
      %s189 = sshll.u32 [#allocation10], 4
      %s190 = int_to_ptr.vmem [resolvable:$true] %s189
      %192 = dma.vmem_to_hbm [thread:$0]  %s190, 128, %s4, [#allocation4]
    $region37: #{tpu_custom_call.1} parent=1 // pred_fallthru
      _
    // Predicated region
    $region38: #{tpu_custom_call.1} parent=1 // pred_check
      _
    $region39: #{tpu_custom_call.1} parent=1 // pred_check_branch
      %194 = sbr.rel (0) target = $region41
    $region40: #{tpu_custom_call.1} parent=1 // pred_region
      %195 = dma.done [#allocation4], 128
    $region41: #{tpu_custom_call.1} parent=1 // pred_fallthru
      _
    %196 = vsyncpa [#allocation3], 1
    %197 = vsyncpa [#allocation6], 1
    %198 = vsyncpa [#allocation9], 1
    %199 = vsyncpa [#allocation4], 1

</llo_original>
